<compile_context>
chip_gen: v7x
topology: tpu7x:2x2x1
jax: 0.10.0
libtpu: 0.0.40
codegen_flags: <defaults>
</compile_context>

<pallas_src>
import functools

import numpy as np
import jax
import jax.numpy as jnp
from jax import lax
from jax.experimental import pallas as pl
from jax.experimental.pallas import tpu as pltpu

_EPS = 1e-5  # torch.nn.BatchNorm2d default eps


def _residual_kernel(use_1x1conv, W, Cin, Cout,
                     x_ref,                     # (B, H, W*Cin) f32, packed NHWC
                     w1_ref,                    # (3*W*Cin, WCo | 2*WCo) bf16
                     w2_ref,                    # (3*W*Cout, WCo) bf16
                     b1_ref, g1_ref, be1_ref,   # (1, WCo) f32, tiled over W
                     b2_ref, g2_ref, be2_ref,
                     b3_ref,
                     out_ref):                  # (B, H, WCo) f32, lane-dense
    B, H, WCi = x_ref.shape
    WCo = out_ref.shape[-1]
    inv_n = 1.0 / (B * H * W)
    f32, bf16 = jnp.float32, jnp.bfloat16

    def build_lhs(act_bf16, wci):
        # H halo as a bf16 value (zero row / activation / zero row); the W halo
        # is folded into the clipped-band rhs, so there is no lane padding.
        # The three kh-shifted views are concatenated along K once -> one matmul.
        z = jnp.zeros((B, 1, wci), bf16)
        pad = jnp.concatenate([z, act_bf16, z], axis=1)          # (B, H+2, wci)
        return jnp.concatenate(
            [pad[:, 0:H, :], pad[:, 1:H + 1, :], pad[:, 2:H + 2, :]],
            axis=-1).reshape(B * H, 3 * wci)                     # (B*H, 3*wci)

    def cross_w_fold(stats):
        # stats: (2, WCo) f32 = [sum; sum-of-squares] per (w, c) lane.
        # Per-channel reduce over W + broadcast back over W via log2(W) cyclic
        # lane rotations by multiples of Cout (XLU; no matmul, no HBM fold).
        # Requires W to be a power of two (asserted in the wrapper).
        s = stats
        shift = Cout
        while shift < WCo:
            s = s + pltpu.roll(s, shift, 1)
            shift *= 2
        return s * inv_n

    def batchnorm(acc, g_ref, be_ref):
        # Train-mode batch statistics, single pass (sum + sum-of-squares),
        # both folded across W in one roll-reduction.
        ssum = jnp.sum(acc, axis=0, keepdims=True)               # (1, WCo)
        ssq = jnp.sum(acc * acc, axis=0, keepdims=True)          # (1, WCo)
        stats = cross_w_fold(jnp.concatenate([ssum, ssq], axis=0))
        mean = stats[0:1, :]
        var = stats[1:2, :] - mean * mean       # biased variance (train-mode BN)
        return (acc - mean) * lax.rsqrt(var + _EPS) * g_ref[...] + be_ref[...]

    x = x_ref[...]                                               # (B, H, W*Cin) f32

    # ---- conv1 (kh-stacked) [+ fused 1x1 projection along N] : ONE MXU matmul
    lhs1 = build_lhs(x.astype(bf16), WCi)                        # (B*H, 3*W*Cin)
    y = jnp.dot(lhs1, w1_ref[...], preferred_element_type=f32)
    if use_1x1conv:
        acc1 = y[:, :WCo] + b1_ref[...]
        res = y[:, WCo:] + b3_ref[...]
    else:
        acc1 = y + b1_ref[...]
        res = x.reshape(B * H, WCi)             # identity path (Cin == Cout)
    y1 = jnp.maximum(batchnorm(acc1, g1_ref, be1_ref), 0.0)

    # ---- conv2 (kh-stacked) -> bn2 : ONE MXU matmul
    lhs2 = build_lhs(y1.reshape(B, H, WCo).astype(bf16), WCo)    # (B*H, 3*W*Cout)
    acc2 = jnp.dot(lhs2, w2_ref[...], preferred_element_type=f32) + b2_ref[...]
    y2 = batchnorm(acc2, g2_ref, be2_ref)

    # Lane-dense output slab: last dim = W*Cout (128) -> unmasked full stores.
    out_ref[...] = jnp.maximum(y2 + res, 0.0).reshape(B, H, WCo)


def _band_conv3x3_weights_np(w_hwio, W):
    """HWIO (3,3,Ci,Co) kernel -> (3*W*Ci, W*Co) kh-stacked clipped-band matrix.

    R[kh*W*Ci + wi*Ci+ci, wo*Co+co] = w[kh, wi-wo+1, ci, co] when |wi-wo| <= 1,
    so a packed row (W*Ci lanes) applies the conv along W with the zero padding
    folded into the band clipping (no activation lane padding needed).
    """
    _, _, Ci, Co = w_hwio.shape
    r = np.zeros((3, W * Ci, W * Co), np.float32)
    for kh in range(3):
        for wo in range(W):
            for kw in range(3):
                wi = wo + kw - 1
                if 0 <= wi < W:
                    r[kh, wi * Ci:(wi + 1) * Ci, wo * Co:(wo + 1) * Co] = w_hwio[kh, kw]
    return r.reshape(3 * W * Ci, W * Co)


def prepare_residual_params(params, W, use_1x1conv=False):
    """One-time host-side packing of the module's weights into the kernel layout.

    Do this ONCE per parameter set (outside the per-step jit) and reuse the
    result: at these shapes the per-call pad/concat/kron/tile XLA ops would
    rival the fused kernel itself.
    """
    w1 = np.asarray(params["w1"], np.float32)        # (3,3,Cin,Cout) HWIO
    w2 = np.asarray(params["w2"], np.float32)        # (3,3,Cout,Cout)
    Cin, Cout = w1.shape[2], w1.shape[3]

    w1_rhs = _band_conv3x3_weights_np(w1, W)         # (3*W*Cin, W*Cout)
    if use_1x1conv:
        # Fuse the 1x1 projection onto conv1's N axis (N = 2*W*Cout = 256 fills
        # the 256-wide v6e/v7x MXU); it multiplies the un-shifted kh=1 K block.
        proj = np.kron(np.eye(W, dtype=np.float32),
                       np.asarray(params["w3"], np.float32))      # (W*Cin, W*Cout)
        pcols = np.zeros((3 * W * Cin, W * Cout), np.float32)
        pcols[W * Cin:2 * W * Cin, :] = proj
        w1_rhs = np.concatenate([w1_rhs, pcols], axis=1)          # (3*W*Cin, 2*W*Cout)
        b3 = np.asarray(params["b3"], np.float32)
    else:
        b3 = np.zeros((Cout,), np.float32)
    w2_rhs = _band_conv3x3_weights_np(w2, W)         # (3*W*Cout, W*Cout)

    tile = lambda v: np.tile(np.asarray(v, np.float32).reshape(1, Cout), (1, W))
    return dict(
        w1=jnp.asarray(w1_rhs, jnp.bfloat16),
        w2=jnp.asarray(w2_rhs, jnp.bfloat16),
        b1=jnp.asarray(tile(params["b1"])),
        g1=jnp.asarray(tile(params["g1"])),
        be1=jnp.asarray(tile(params["be1"])),
        b2=jnp.asarray(tile(params["b2"])),
        g2=jnp.asarray(tile(params["g2"])),
        be2=jnp.asarray(tile(params["be2"])),
        b3=jnp.asarray(tile(b3)),
    )


@functools.partial(jax.jit, static_argnames=("use_1x1conv", "strides"))
def residual_forward(x_nchw, packed, use_1x1conv=False, strides=1):
    """Forward pass of Residual.  x is NCHW; `packed` from prepare_residual_params."""
    # TODO(synk): strides > 1 not implemented (module default strides=1).
    assert strides == 1, "strides > 1 not implemented"
    B, Cin, H, W = x_nchw.shape
    WCo = packed["w2"].shape[-1]
    Cout = WCo // W
    # TODO(synk): non-power-of-two W would need an iota-generated fold instead
    # of the log2(W) lane-roll reduction.
    assert W & (W - 1) == 0, "cross-W BN fold uses log2(W) lane rolls"
    if not use_1x1conv:
        assert Cin == Cout, "identity residual requires input_channels == num_channels"

    # NCHW -> packed lane-dense (B, H, W*Cin) (one XLA transpose+reshape copy).
    x = jnp.transpose(x_nchw, (0, 2, 3, 1)).astype(jnp.float32).reshape(B, H, W * Cin)

    vmem = pl.BlockSpec(memory_space=pltpu.MemorySpace.VMEM)
    out = pl.pallas_call(
        functools.partial(_residual_kernel, use_1x1conv, W, Cin, Cout),
        out_shape=jax.ShapeDtypeStruct((B, H, WCo), jnp.float32),
        in_specs=[vmem] * 10,
        out_specs=vmem,
    )(x, packed["w1"], packed["w2"],
      packed["b1"], packed["g1"], packed["be1"],
      packed["b2"], packed["g2"], packed["be2"], packed["b3"])
    # lane-dense (B, H, W*Cout) slab -> NCHW
    return jnp.transpose(out.reshape(B, H, W, Cout), (0, 3, 1, 2))


def residual_reference(x_nchw, params, use_1x1conv=False):
    """Pure-JAX reference for the PyTorch forward: train-mode BatchNorm, convs
    evaluated with bf16 operands / f32 accumulation (the kernel's MXU-native
    matmul precision)."""
    x = jnp.transpose(x_nchw, (0, 2, 3, 1)).astype(jnp.float32)
    dn = ('NHWC', 'HWIO', 'NHWC')

    def conv(a, w, pad):
        return lax.conv_general_dilated(
            a.astype(jnp.bfloat16), w.astype(jnp.bfloat16), (1, 1), pad,
            dimension_numbers=dn, preferred_element_type=jnp.float32)

    def bn(y, g, b):
        m = jnp.mean(y, axis=(0, 1, 2))
        v = jnp.var(y, axis=(0, 1, 2))
        return (y - m) * lax.rsqrt(v + _EPS) * g + b

    y = conv(x, params["w1"], ((1, 1), (1, 1))) + params["b1"]
    y = jax.nn.relu(bn(y, params["g1"], params["be1"]))
    y = conv(y, params["w2"], ((1, 1), (1, 1))) + params["b2"]
    y = bn(y, params["g2"], params["be2"])
    if use_1x1conv:
        r = conv(x, params["w3"][None, None], ((0, 0), (0, 0))) + params["b3"]
    else:
        r = x
    return jnp.transpose(jax.nn.relu(y + r), (0, 3, 1, 2))


if __name__ == "__main__":
    key = jax.random.PRNGKey(0)
    ks = jax.random.split(key, 8)

    # Residual(input_channels=4, num_channels=8, use_1x1conv=True, strides=1)
    B, Cin, Cout, H, W = 2, 4, 8, 16, 16
    params = dict(
        w1=0.1 * jax.random.normal(ks[0], (3, 3, Cin, Cout), jnp.float32),
        b1=0.1 * jax.random.normal(ks[1], (Cout,), jnp.float32),
        w2=0.1 * jax.random.normal(ks[2], (3, 3, Cout, Cout), jnp.float32),
        b2=0.1 * jax.random.normal(ks[3], (Cout,), jnp.float32),
        w3=0.1 * jax.random.normal(ks[4], (Cin, Cout), jnp.float32),
        b3=0.1 * jax.random.normal(ks[5], (Cout,), jnp.float32),
        g1=jnp.ones((Cout,), jnp.float32),    # BatchNorm2d default init: weight=1
        be1=jnp.zeros((Cout,), jnp.float32),  # bias=0
        g2=jnp.ones((Cout,), jnp.float32),
        be2=jnp.zeros((Cout,), jnp.float32),
    )
    x = jax.random.normal(ks[6], (B, Cin, H, W), jnp.float32)    # NCHW, like PyTorch

    packed = prepare_residual_params(params, W, use_1x1conv=True)   # one-time packing
    out = jax.block_until_ready(residual_forward(x, packed, use_1x1conv=True))
    ref = jax.block_until_ready(residual_reference(x, params, use_1x1conv=True))
    np.testing.assert_allclose(np.asarray(out), np.asarray(ref), rtol=1e-2, atol=1e-2)

    # Residual(input_channels=8, num_channels=8, use_1x1conv=False) - identity path
    params_id = dict(params,
                     w1=0.1 * jax.random.normal(ks[7], (3, 3, Cout, Cout), jnp.float32))
    x_id = jax.random.normal(ks[6], (B, Cout, H, W), jnp.float32)
    packed_id = prepare_residual_params(params_id, W, use_1x1conv=False)
    out_id = jax.block_until_ready(residual_forward(x_id, packed_id, use_1x1conv=False))
    ref_id = jax.block_until_ready(residual_reference(x_id, params_id, use_1x1conv=False))
    np.testing.assert_allclose(np.asarray(out_id), np.asarray(ref_id),
                               rtol=1e-2, atol=1e-2)

    print("KERNEL_OK")
</pallas_src>

<mosaic_0001>
module attributes {stable_mosaic.version = 11 : i64} {
  func.func @_residual_kernel(%arg0: memref<2x16x64xf32, #tpu.memory_space<vmem>>, %arg1: memref<192x256xbf16, #tpu.memory_space<vmem>>, %arg2: memref<384x128xbf16, #tpu.memory_space<vmem>>, %arg3: memref<1x128xf32, #tpu.memory_space<vmem>>, %arg4: memref<1x128xf32, #tpu.memory_space<vmem>>, %arg5: memref<1x128xf32, #tpu.memory_space<vmem>>, %arg6: memref<1x128xf32, #tpu.memory_space<vmem>>, %arg7: memref<1x128xf32, #tpu.memory_space<vmem>>, %arg8: memref<1x128xf32, #tpu.memory_space<vmem>>, %arg9: memref<1x128xf32, #tpu.memory_space<vmem>>, %arg10: memref<2x16x128xf32, #tpu.memory_space<vmem>>) attributes {dimension_semantics = [], scalar_prefetch = 0 : i64, scratch_operands = 0 : i64, tpu.core_type = #tpu.core_type<tc>} {
    %c0 = arith.constant 0 : index
    %c0_0 = arith.constant 0 : index
    %c0_1 = arith.constant 0 : index
    %0 = vector.load %arg0[%c0, %c0_0, %c0_1] : memref<2x16x64xf32, #tpu.memory_space<vmem>>, vector<2x16x64xf32>
    %1 = arith.truncf %0 : vector<2x16x64xf32> to vector<2x16x64xbf16>
    %cst = arith.constant 0.000000e+00 : bf16
    %2 = vector.broadcast %cst : bf16 to vector<2x1x64xbf16>
    %3 = tpu.concatenate %2, %1, %2 in 1 : vector<2x1x64xbf16>, vector<2x16x64xbf16>, vector<2x1x64xbf16> -> vector<2x18x64xbf16>
    %4 = vector.extract_strided_slice %3 {offsets = [0, 0, 0], sizes = [2, 16, 64], strides = [1, 1, 1]} : vector<2x18x64xbf16> to vector<2x16x64xbf16>
    %5 = vector.extract_strided_slice %3 {offsets = [0, 1, 0], sizes = [2, 16, 64], strides = [1, 1, 1]} : vector<2x18x64xbf16> to vector<2x16x64xbf16>
    %6 = vector.extract_strided_slice %3 {offsets = [0, 2, 0], sizes = [2, 16, 64], strides = [1, 1, 1]} : vector<2x18x64xbf16> to vector<2x16x64xbf16>
    %7 = tpu.concatenate %4, %5, %6 in 2 : vector<2x16x64xbf16>, vector<2x16x64xbf16>, vector<2x16x64xbf16> -> vector<2x16x192xbf16>
    %8 = vector.shape_cast %7 : vector<2x16x192xbf16> to vector<32x192xbf16>
    %c0_2 = arith.constant 0 : index
    %c0_3 = arith.constant 0 : index
    %9 = vector.load %arg1[%c0_2, %c0_3] : memref<192x256xbf16, #tpu.memory_space<vmem>>, vector<192x256xbf16>
    %cst_4 = arith.constant dense<0.000000e+00> : vector<32x256xf32>
    %10 = tpu.matmul %8, %9, %cst_4 {dimension_numbers = #tpu.dot_dimension_numbers<[1], [0], [0], [1], [0, 0, 1, 1], [], []>} : vector<32x192xbf16>, vector<192x256xbf16>, vector<32x256xf32> -> vector<32x256xf32>
    %11 = vector.extract_strided_slice %10 {offsets = [0, 0], sizes = [32, 128], strides = [1, 1]} : vector<32x256xf32> to vector<32x128xf32>
    %c0_5 = arith.constant 0 : index
    %c0_6 = arith.constant 0 : index
    %12 = vector.load %arg3[%c0_5, %c0_6] : memref<1x128xf32, #tpu.memory_space<vmem>>, vector<1x128xf32>
    %13 = vector.broadcast %12 : vector<1x128xf32> to vector<32x128xf32>
    %14 = arith.addf %11, %13 : vector<32x128xf32>
    %15 = vector.extract_strided_slice %10 {offsets = [0, 128], sizes = [32, 128], strides = [1, 1]} : vector<32x256xf32> to vector<32x128xf32>
    %c0_7 = arith.constant 0 : index
    %c0_8 = arith.constant 0 : index
    %16 = vector.load %arg9[%c0_7, %c0_8] : memref<1x128xf32, #tpu.memory_space<vmem>>, vector<1x128xf32>
    %17 = vector.broadcast %16 : vector<1x128xf32> to vector<32x128xf32>
    %18 = arith.addf %15, %17 : vector<32x128xf32>
    %cst_9 = arith.constant dense<0.000000e+00> : vector<128xf32>
    %19 = vector.multi_reduction <add>, %14, %cst_9 [0] : vector<32x128xf32> to vector<128xf32>
    %20 = vector.shape_cast %19 : vector<128xf32> to vector<1x128xf32>
    %21 = arith.mulf %14, %14 : vector<32x128xf32>
    %cst_10 = arith.constant dense<0.000000e+00> : vector<128xf32>
    %22 = vector.multi_reduction <add>, %21, %cst_10 [0] : vector<32x128xf32> to vector<128xf32>
    %23 = vector.shape_cast %22 : vector<128xf32> to vector<1x128xf32>
    %24 = tpu.concatenate %20, %23 in 0 : vector<1x128xf32>, vector<1x128xf32> -> vector<2x128xf32>
    %c8_i32 = arith.constant 8 : i32
    %25 = tpu.dynamic_rotate %24 by %c8_i32 dim 1 : vector<2x128xf32>, i32 -> vector<2x128xf32>
    %26 = arith.addf %24, %25 : vector<2x128xf32>
    %c16_i32 = arith.constant 16 : i32
    %27 = tpu.dynamic_rotate %26 by %c16_i32 dim 1 : vector<2x128xf32>, i32 -> vector<2x128xf32>
    %28 = arith.addf %26, %27 : vector<2x128xf32>
    %c32_i32 = arith.constant 32 : i32
    %29 = tpu.dynamic_rotate %28 by %c32_i32 dim 1 : vector<2x128xf32>, i32 -> vector<2x128xf32>
    %30 = arith.addf %28, %29 : vector<2x128xf32>
    %c64_i32 = arith.constant 64 : i32
    %31 = tpu.dynamic_rotate %30 by %c64_i32 dim 1 : vector<2x128xf32>, i32 -> vector<2x128xf32>
    %32 = arith.addf %30, %31 : vector<2x128xf32>
    %cst_11 = arith.constant 0.001953125 : f32
    %33 = vector.broadcast %cst_11 : f32 to vector<2x128xf32>
    %34 = arith.mulf %32, %33 : vector<2x128xf32>
    %35 = vector.extract_strided_slice %34 {offsets = [0, 0], sizes = [1, 128], strides = [1, 1]} : vector<2x128xf32> to vector<1x128xf32>
    %36 = vector.extract_strided_slice %34 {offsets = [1, 0], sizes = [1, 128], strides = [1, 1]} : vector<2x128xf32> to vector<1x128xf32>
    %37 = arith.mulf %35, %35 : vector<1x128xf32>
    %38 = arith.subf %36, %37 : vector<1x128xf32>
    %39 = vector.broadcast %35 : vector<1x128xf32> to vector<32x128xf32>
    %40 = arith.subf %14, %39 : vector<32x128xf32>
    %cst_12 = arith.constant 9.99999974E-6 : f32
    %41 = vector.broadcast %cst_12 : f32 to vector<1x128xf32>
    %42 = arith.addf %38, %41 : vector<1x128xf32>
    %43 = math.rsqrt %42 : vector<1x128xf32>
    %44 = vector.broadcast %43 : vector<1x128xf32> to vector<32x128xf32>
    %45 = arith.mulf %40, %44 : vector<32x128xf32>
    %c0_13 = arith.constant 0 : index
    %c0_14 = arith.constant 0 : index
    %46 = vector.load %arg4[%c0_13, %c0_14] : memref<1x128xf32, #tpu.memory_space<vmem>>, vector<1x128xf32>
    %47 = vector.broadcast %46 : vector<1x128xf32> to vector<32x128xf32>
    %48 = arith.mulf %45, %47 : vector<32x128xf32>
    %c0_15 = arith.constant 0 : index
    %c0_16 = arith.constant 0 : index
    %49 = vector.load %arg5[%c0_15, %c0_16] : memref<1x128xf32, #tpu.memory_space<vmem>>, vector<1x128xf32>
    %50 = vector.broadcast %49 : vector<1x128xf32> to vector<32x128xf32>
    %51 = arith.addf %48, %50 : vector<32x128xf32>
    %cst_17 = arith.constant 0.000000e+00 : f32
    %52 = vector.broadcast %cst_17 : f32 to vector<32x128xf32>
    %53 = arith.maximumf %51, %52 : vector<32x128xf32>
    %54 = vector.shape_cast %53 : vector<32x128xf32> to vector<2x16x128xf32>
    %55 = arith.truncf %54 : vector<2x16x128xf32> to vector<2x16x128xbf16>
    %cst_18 = arith.constant 0.000000e+00 : bf16
    %56 = vector.broadcast %cst_18 : bf16 to vector<2x1x128xbf16>
    %57 = tpu.concatenate %56, %55, %56 in 1 : vector<2x1x128xbf16>, vector<2x16x128xbf16>, vector<2x1x128xbf16> -> vector<2x18x128xbf16>
    %58 = vector.extract_strided_slice %57 {offsets = [0, 0, 0], sizes = [2, 16, 128], strides = [1, 1, 1]} : vector<2x18x128xbf16> to vector<2x16x128xbf16>
    %59 = vector.extract_strided_slice %57 {offsets = [0, 1, 0], sizes = [2, 16, 128], strides = [1, 1, 1]} : vector<2x18x128xbf16> to vector<2x16x128xbf16>
    %60 = vector.extract_strided_slice %57 {offsets = [0, 2, 0], sizes = [2, 16, 128], strides = [1, 1, 1]} : vector<2x18x128xbf16> to vector<2x16x128xbf16>
    %61 = tpu.concatenate %58, %59, %60 in 2 : vector<2x16x128xbf16>, vector<2x16x128xbf16>, vector<2x16x128xbf16> -> vector<2x16x384xbf16>
    %62 = vector.shape_cast %61 : vector<2x16x384xbf16> to vector<32x384xbf16>
    %c0_19 = arith.constant 0 : index
    %c0_20 = arith.constant 0 : index
    %63 = vector.load %arg2[%c0_19, %c0_20] : memref<384x128xbf16, #tpu.memory_space<vmem>>, vector<384x128xbf16>
    %cst_21 = arith.constant dense<0.000000e+00> : vector<32x128xf32>
    %64 = tpu.matmul %62, %63, %cst_21 {dimension_numbers = #tpu.dot_dimension_numbers<[1], [0], [0], [1], [0, 0, 1, 1], [], []>} : vector<32x384xbf16>, vector<384x128xbf16>, vector<32x128xf32> -> vector<32x128xf32>
    %c0_22 = arith.constant 0 : index
    %c0_23 = arith.constant 0 : index
    %65 = vector.load %arg6[%c0_22, %c0_23] : memref<1x128xf32, #tpu.memory_space<vmem>>, vector<1x128xf32>
    %66 = vector.broadcast %65 : vector<1x128xf32> to vector<32x128xf32>
    %67 = arith.addf %64, %66 : vector<32x128xf32>
    %cst_24 = arith.constant dense<0.000000e+00> : vector<128xf32>
    %68 = vector.multi_reduction <add>, %67, %cst_24 [0] : vector<32x128xf32> to vector<128xf32>
    %69 = vector.shape_cast %68 : vector<128xf32> to vector<1x128xf32>
    %70 = arith.mulf %67, %67 : vector<32x128xf32>
    %cst_25 = arith.constant dense<0.000000e+00> : vector<128xf32>
    %71 = vector.multi_reduction <add>, %70, %cst_25 [0] : vector<32x128xf32> to vector<128xf32>
    %72 = vector.shape_cast %71 : vector<128xf32> to vector<1x128xf32>
    %73 = tpu.concatenate %69, %72 in 0 : vector<1x128xf32>, vector<1x128xf32> -> vector<2x128xf32>
    %c8_i32_26 = arith.constant 8 : i32
    %74 = tpu.dynamic_rotate %73 by %c8_i32_26 dim 1 : vector<2x128xf32>, i32 -> vector<2x128xf32>
    %75 = arith.addf %73, %74 : vector<2x128xf32>
    %c16_i32_27 = arith.constant 16 : i32
    %76 = tpu.dynamic_rotate %75 by %c16_i32_27 dim 1 : vector<2x128xf32>, i32 -> vector<2x128xf32>
    %77 = arith.addf %75, %76 : vector<2x128xf32>
    %c32_i32_28 = arith.constant 32 : i32
    %78 = tpu.dynamic_rotate %77 by %c32_i32_28 dim 1 : vector<2x128xf32>, i32 -> vector<2x128xf32>
    %79 = arith.addf %77, %78 : vector<2x128xf32>
    %c64_i32_29 = arith.constant 64 : i32
    %80 = tpu.dynamic_rotate %79 by %c64_i32_29 dim 1 : vector<2x128xf32>, i32 -> vector<2x128xf32>
    %81 = arith.addf %79, %80 : vector<2x128xf32>
    %cst_30 = arith.constant 0.001953125 : f32
    %82 = vector.broadcast %cst_30 : f32 to vector<2x128xf32>
    %83 = arith.mulf %81, %82 : vector<2x128xf32>
    %84 = vector.extract_strided_slice %83 {offsets = [0, 0], sizes = [1, 128], strides = [1, 1]} : vector<2x128xf32> to vector<1x128xf32>
    %85 = vector.extract_strided_slice %83 {offsets = [1, 0], sizes = [1, 128], strides = [1, 1]} : vector<2x128xf32> to vector<1x128xf32>
    %86 = arith.mulf %84, %84 : vector<1x128xf32>
    %87 = arith.subf %85, %86 : vector<1x128xf32>
    %88 = vector.broadcast %84 : vector<1x128xf32> to vector<32x128xf32>
    %89 = arith.subf %67, %88 : vector<32x128xf32>
    %cst_31 = arith.constant 9.99999974E-6 : f32
    %90 = vector.broadcast %cst_31 : f32 to vector<1x128xf32>
    %91 = arith.addf %87, %90 : vector<1x128xf32>
    %92 = math.rsqrt %91 : vector<1x128xf32>
    %93 = vector.broadcast %92 : vector<1x128xf32> to vector<32x128xf32>
    %94 = arith.mulf %89, %93 : vector<32x128xf32>
    %c0_32 = arith.constant 0 : index
    %c0_33 = arith.constant 0 : index
    %95 = vector.load %arg7[%c0_32, %c0_33] : memref<1x128xf32, #tpu.memory_space<vmem>>, vector<1x128xf32>
    %96 = vector.broadcast %95 : vector<1x128xf32> to vector<32x128xf32>
    %97 = arith.mulf %94, %96 : vector<32x128xf32>
    %c0_34 = arith.constant 0 : index
    %c0_35 = arith.constant 0 : index
    %98 = vector.load %arg8[%c0_34, %c0_35] : memref<1x128xf32, #tpu.memory_space<vmem>>, vector<1x128xf32>
    %99 = vector.broadcast %98 : vector<1x128xf32> to vector<32x128xf32>
    %100 = arith.addf %97, %99 : vector<32x128xf32>
    %101 = arith.addf %100, %18 : vector<32x128xf32>
    %cst_36 = arith.constant 0.000000e+00 : f32
    %102 = vector.broadcast %cst_36 : f32 to vector<32x128xf32>
    %103 = arith.maximumf %101, %102 : vector<32x128xf32>
    %104 = vector.shape_cast %103 : vector<32x128xf32> to vector<2x16x128xf32>
    %c0_37 = arith.constant 0 : index
    %c0_38 = arith.constant 0 : index
    %c0_39 = arith.constant 0 : index
    %105 = vector.load %arg10[%c0_37, %c0_38, %c0_39] : memref<2x16x128xf32, #tpu.memory_space<vmem>>, vector<2x16x128xf32>
    tpu.vector_store %arg10[%c0_37, %c0_38, %c0_39], %104 {strides = array<i32>} : memref<2x16x128xf32, #tpu.memory_space<vmem>>, vector<2x16x128xf32>,
    return
  }
}

</mosaic_0001>

<llo_original>
// kernel: residual_forward.1
$region0: #{residual_forward.1}
  #allocation0 [shape = 'u32[]', space=smem, size = 0x4, offset = 0x4, fixed_abs, tag = 'smem constant byte address 0x4 - core index']
  #allocation1 [shape = 'u32[144,128]{1,0:T(1,128)}', space=vmem, size = 0x12000, scoped, tag = 'internal scratch']
  %s0 = inlined_call_operand.vmem [shape: f32[2,16,64], index: 0, kind: input, shape index: {}]
  %s1 = inlined_call_operand.vmem [shape: bf16[192,256], index: 1, kind: input, shape index: {}]
  %s2 = inlined_call_operand.vmem [shape: bf16[384,128], index: 2, kind: input, shape index: {}]
  %s3 = inlined_call_operand.vmem [shape: f32[1,128], index: 3, kind: input, shape index: {}]
  %s4 = inlined_call_operand.vmem [shape: f32[1,128], index: 4, kind: input, shape index: {}]
  %s5 = inlined_call_operand.vmem [shape: f32[1,128], index: 5, kind: input, shape index: {}]
  %s6 = inlined_call_operand.vmem [shape: f32[1,128], index: 6, kind: input, shape index: {}]
  %s7 = inlined_call_operand.vmem [shape: f32[1,128], index: 7, kind: input, shape index: {}]
  %s8 = inlined_call_operand.vmem [shape: f32[1,128], index: 8, kind: input, shape index: {}]
  %s9 = inlined_call_operand.vmem [shape: f32[1,128], index: 9, kind: input, shape index: {}]
  %s10 = inlined_call_operand.vmem [shape: f32[2,16,128], index: 10, kind: output, shape index: {}]
  %s11 = sld [smem:[#allocation0]]
  $region50: #{residual_forward.1} parent=0
    _
  %s13 = ssub.s32 1, %s11
  %s14 = scalar_select 0, %s13, %s11
  // Predicated region
  $region2: #{residual_forward.1} parent=0 // pred_check
    _
  $region3: #{residual_forward.1} parent=0 // pred_check_branch
    %16 = sbr.rel (0) target = $region5
  $region4: #{residual_forward.1} parent=0 // pred_region
    _
  $region5: #{residual_forward.1} parent=0 // pred_fallthru
    _
  // Predicated region
  $region6: #{residual_forward.1} parent=0 // pred_check
    _
  $region7: #{residual_forward.1} parent=0 // pred_check_branch
    %18 = sbr.rel (0) target = $region9
  $region8: #{residual_forward.1} parent=0 // pred_region
    _
  $region9: #{residual_forward.1} parent=0 // pred_fallthru
    _
  // Predicated region
  $region10: #{residual_forward.1} parent=0 // pred_check
    _
  $region11: #{residual_forward.1} parent=0 // pred_check_branch
    %20 = sbr.rel (0) target = $region13
  $region12: #{residual_forward.1} parent=0 // pred_region
    _
  $region13: #{residual_forward.1} parent=0 // pred_fallthru
    _
  // Predicated region
  $region14: #{residual_forward.1} parent=0 // pred_check
    _
  $region15: #{residual_forward.1} parent=0 // pred_check_branch
    %22 = sbr.rel (0) target = $region17
  $region16: #{residual_forward.1} parent=0 // pred_region
    _
  $region17: #{residual_forward.1} parent=0 // pred_fallthru
    _
  // Predicated region
  $region18: #{residual_forward.1} parent=0 // pred_check
    _
  $region19: #{residual_forward.1} parent=0 // pred_check_branch
    %24 = sbr.rel (0) target = $region21
  $region20: #{residual_forward.1} parent=0 // pred_region
    _
  $region21: #{residual_forward.1} parent=0 // pred_fallthru
    _
  // Predicated region
  $region22: #{residual_forward.1} parent=0 // pred_check
    _
  $region23: #{residual_forward.1} parent=0 // pred_check_branch
    %26 = sbr.rel (0) target = $region25
  $region24: #{residual_forward.1} parent=0 // pred_region
    _
  $region25: #{residual_forward.1} parent=0 // pred_fallthru
    _
  // Predicated region
  $region26: #{residual_forward.1} parent=0 // pred_check
    _
  $region27: #{residual_forward.1} parent=0 // pred_check_branch
    %28 = sbr.rel (0) target = $region29
  $region28: #{residual_forward.1} parent=0 // pred_region
    _
  $region29: #{residual_forward.1} parent=0 // pred_fallthru
    _
  // Predicated region
  $region30: #{residual_forward.1} parent=0 // pred_check
    _
  $region31: #{residual_forward.1} parent=0 // pred_check_branch
    %30 = sbr.rel (0) target = $region33
  $region32: #{residual_forward.1} parent=0 // pred_region
    _
  $region33: #{residual_forward.1} parent=0 // pred_fallthru
    _
  // Predicated region
  $region34: #{residual_forward.1} parent=0 // pred_check
    _
  $region35: #{residual_forward.1} parent=0 // pred_check_branch
    %32 = sbr.rel (0) target = $region37
  $region36: #{residual_forward.1} parent=0 // pred_region
    _
  $region37: #{residual_forward.1} parent=0 // pred_fallthru
    _
  // Predicated region
  $region38: #{residual_forward.1} parent=0 // pred_check
    _
  $region39: #{residual_forward.1} parent=0 // pred_check_branch
    %34 = sbr.rel (0) target = $region41
  $region40: #{residual_forward.1} parent=0 // pred_region
    _
  $region41: #{residual_forward.1} parent=0 // pred_fallthru
    _
  %v36 = vld [vmem:[%s0] sm:$0xff]
  %v37 = vld [vmem:[%s0 + $0x8] sm:$0xff]
  %v38 = vld [vmem:[%s0 + $0x10] sm:$0xff]
  %v39 = vld [vmem:[%s0 + $0x18] sm:$0xff]
  %v40 = vpack.c.bf16 %v37, %v36
  %v41 = vpack.c.bf16 %v39, %v38
  %v43 = vshrl.u32 %v40, 16
  %v45 = vrot.slane %v43, 7
  %v46 = vshll.u32 %v40, 16
  %v48 = vor.u32 %v45, %v46
  %v50 = vshrl.u32 %v41, 16
  %v52 = vrot.slane %v50, 7
  %v53 = vshll.u32 %v41, 16
  %v55 = vor.u32 %v52, %v53
  %vm60 = vcmask 1040384
  %vm61 = vsmask.f32 256
  %vm62 = vmand %vm60, %vm61
  %v63 = vsel %vm62, 0, %v48
  %v64 = vsel %vm62, 0, %v55
  %v65 = vsel %vm62, %v45, 0
  %v66 = vsel %vm62, %v52, 0
  %vm67 = vsmask.f32 7424
  %v69 = vshrl.u32 %v63, 16
  %v71 = vshll.u32 %v63, 16
  %v73 = vrot.slane %v71, 1
  %v74 = vor.u32 %v69, %v73
  %v76 = vshll.u32 %v65, 16
  %v78 = vrot.slane %v76, 1
  %v79 = vsel %vm67, %v74, %v78
  %v81 = vshrl.u32 %v64, 16
  %v83 = vshll.u32 %v64, 16
  %v85 = vrot.slane %v83, 1
  %v86 = vor.u32 %v81, %v85
  %v88 = vshll.u32 %v66, 16
  %v90 = vrot.slane %v88, 1
  %v91 = vsel %vm67, %v86, %v90
  %92 = vrot.lane.b32.xlu0 %v79, 64
  %v93 = vpop.permute.xlu0 %92
  %94 = vrot.lane.b32.xlu0 %v91, 64
  %v95 = vpop.permute.xlu0 %94
  %vm100 = vcmask 1046528
  %v101 = vrot.slane %v63, 1
  %v102 = vrot.slane %v65, 1
  %v103 = vsel %vm100, %v101, %v102
  %v104 = vrot.slane %v64, 1
  %v105 = vrot.slane %v66, 1
  %v106 = vsel %vm100, %v104, %v105
  %vm107 = vcmask 523264
  %v109 = vsel %vm107, %v63, %v93
  %v112 = vsel %vm107, %v64, %v95
  %v114 = vld [vmem:[%s1] sm:$0xff]
  %v115 = vld [vmem:[%s1 + $0x8] sm:$0xff]
  %v116 = vld [vmem:[%s1 + $0x10] sm:$0xff]
  %v117 = vld [vmem:[%s1 + $0x18] sm:$0xff]
  %v118 = vld [vmem:[%s1 + $0x20] sm:$0xff]
  %v119 = vld [vmem:[%s1 + $0x28] sm:$0xff]
  %v120 = vld [vmem:[%s1 + $0x30] sm:$0xff]
  %v121 = vld [vmem:[%s1 + $0x38] sm:$0xff]
  %v122 = vld [vmem:[%s1 + $0x40] sm:$0xff]
  %v123 = vld [vmem:[%s1 + $0x48] sm:$0xff]
  %v124 = vld [vmem:[%s1 + $0x50] sm:$0xff]
  %v125 = vld [vmem:[%s1 + $0x58] sm:$0xff]
  %v126 = vld [vmem:[%s1 + $0x60] sm:$0xff]
  %v127 = vld [vmem:[%s1 + $0x68] sm:$0xff]
  %v128 = vld [vmem:[%s1 + $0x70] sm:$0xff]
  %v129 = vld [vmem:[%s1 + $0x78] sm:$0xff]
  %v130 = vld [vmem:[%s1 + $0x80] sm:$0xff]
  %v131 = vld [vmem:[%s1 + $0x88] sm:$0xff]
  %v132 = vld [vmem:[%s1 + $0x90] sm:$0xff]
  %v133 = vld [vmem:[%s1 + $0x98] sm:$0xff]
  %v134 = vld [vmem:[%s1 + $0xa0] sm:$0xff]
  %v135 = vld [vmem:[%s1 + $0xa8] sm:$0xff]
  %v136 = vld [vmem:[%s1 + $0xb0] sm:$0xff]
  %v137 = vld [vmem:[%s1 + $0xb8] sm:$0xff]
  %v162 = vunpack.c.l.b16 %v114
  %v163 = vunpack.c.h.b16 %v114
  %v164 = vunpack.c.l.b16 %v115
  %v165 = vunpack.c.h.b16 %v115
  %v166 = vunpack.c.l.b16 %v116
  %v167 = vunpack.c.h.b16 %v116
  %v168 = vunpack.c.l.b16 %v117
  %v169 = vunpack.c.h.b16 %v117
  %v170 = vunpack.c.l.b16 %v118
  %v171 = vunpack.c.h.b16 %v118
  %v172 = vunpack.c.l.b16 %v119
  %v173 = vunpack.c.h.b16 %v119
  %v174 = vunpack.c.l.b16 %v120
  %v175 = vunpack.c.h.b16 %v120
  %v176 = vunpack.c.l.b16 %v121
  %v177 = vunpack.c.h.b16 %v121
  %v178 = vunpack.c.l.b16 %v122
  %v179 = vunpack.c.h.b16 %v122
  %v180 = vunpack.c.l.b16 %v123
  %v181 = vunpack.c.h.b16 %v123
  %v182 = vunpack.c.l.b16 %v124
  %v183 = vunpack.c.h.b16 %v124
  %v184 = vunpack.c.l.b16 %v125
  %v185 = vunpack.c.h.b16 %v125
  %v186 = vunpack.c.l.b16 %v126
  %v187 = vunpack.c.h.b16 %v126
  %v188 = vunpack.c.l.b16 %v127
  %v189 = vunpack.c.h.b16 %v127
  %v190 = vunpack.c.l.b16 %v128
  %v191 = vunpack.c.h.b16 %v128
  %v192 = vunpack.c.l.b16 %v129
  %v193 = vunpack.c.h.b16 %v129
  %v194 = vunpack.c.l.b16 %v130
  %v195 = vunpack.c.h.b16 %v130
  %v196 = vunpack.c.l.b16 %v131
  %v197 = vunpack.c.h.b16 %v131
  %v198 = vunpack.c.l.b16 %v132
  %v199 = vunpack.c.h.b16 %v132
  %v200 = vunpack.c.l.b16 %v133
  %v201 = vunpack.c.h.b16 %v133
  %v202 = vunpack.c.l.b16 %v134
  %v203 = vunpack.c.h.b16 %v134
  %v204 = vunpack.c.l.b16 %v135
  %v205 = vunpack.c.h.b16 %v135
  %v206 = vunpack.c.l.b16 %v136
  %v207 = vunpack.c.h.b16 %v136
  %v208 = vunpack.c.l.b16 %v137
  %v209 = vunpack.c.h.b16 %v137
  %v210 = vpack.c.b16 %v164, %v162
  %v211 = vpack.c.b16 %v165, %v163
  %v212 = vpack.c.b16 %v168, %v166
  %v213 = vpack.c.b16 %v169, %v167
  %v214 = vpack.c.b16 %v172, %v170
  %v215 = vpack.c.b16 %v173, %v171
  %v216 = vpack.c.b16 %v176, %v174
  %v217 = vpack.c.b16 %v177, %v175
  %v218 = vpack.c.b16 %v180, %v178
  %v219 = vpack.c.b16 %v181, %v179
  %v220 = vpack.c.b16 %v184, %v182
  %v221 = vpack.c.b16 %v185, %v183
  %v222 = vpack.c.b16 %v188, %v186
  %v223 = vpack.c.b16 %v189, %v187
  %v224 = vpack.c.b16 %v192, %v190
  %v225 = vpack.c.b16 %v193, %v191
  %v226 = vpack.c.b16 %v196, %v194
  %v227 = vpack.c.b16 %v197, %v195
  %v228 = vpack.c.b16 %v200, %v198
  %v229 = vpack.c.b16 %v201, %v199
  %v230 = vpack.c.b16 %v204, %v202
  %v231 = vpack.c.b16 %v205, %v203
  %v232 = vpack.c.b16 %v208, %v206
  %v233 = vpack.c.b16 %v209, %v207
  %v259 = vsel %vm107, %v103, 0
  %v262 = vsel %vm107, %v106, 0
  %264 = vmatprep.subr.bf16.mxu0 %v211
  %265 = vmatpush1.bf16.msra.mxu0 %v210
  %266 = vmatprep.subr.bf16.mxu0 %v213
  %267 = vmatpush1.bf16.msra.mxu0 %v212
  %268 = vmatprep.subr.bf16.mxu0 %v215
  %269 = vmatpush1.bf16.msra.mxu0 %v214
  %270 = vmatprep.subr.bf16.mxu0 %v217
  %271 = vmatpush1.bf16.msra.mxu0 %v216
  %272 = vmatprep.subr.bf16.mxu0 %v219
  %273 = vmatpush1.bf16.msra.mxu0 %v218
  %274 = vmatprep.subr.bf16.mxu0 %v221
  %275 = vmatpush1.bf16.msra.mxu0 %v220
  %276 = vmatprep.subr.bf16.mxu0 %v223
  %277 = vmatpush1.bf16.msra.mxu0 %v222
  %278 = vmatprep.subr.bf16.mxu0 %v225
  %279 = vmatpush1.bf16.msra.mxu0 %v224
  %280 = vmatprep.subr.bf16.mxu0 %v227
  %281 = vmatpush1.bf16.msra.mxu0 %v226
  %282 = vmatprep.subr.bf16.mxu0 %v229
  %283 = vmatpush1.bf16.msra.mxu0 %v228
  %284 = vmatprep.subr.bf16.mxu0 %v231
  %285 = vmatpush1.bf16.msra.mxu0 %v230
  %286 = vmatprep.subr.bf16.mxu0 %v233
  %287 = vmatpush1.bf16.msra.mxu0 %v232
  %288 = vmatprep.subr.bf16.mxu0 0
  %289 = vmatpush1.bf16.msra.mxu0 0
  %290 = vmatprep.subr.bf16.mxu0 0
  %291 = vmatpush1.bf16.msra.mxu0 0
  %292 = vmatprep.subr.bf16.mxu0 0
  %293 = vmatpush1.bf16.msra.mxu0 0
  %294 = vmatprep.subr.bf16.mxu0 0
  %295 = vmatpush1.bf16.msra.mxu0 0
  %296 = vmatprep.mubr.bf16.mxu0 %v259
  %297 = vmatmul.mubr.bf16.gmra.mrb[0].mxu0 %v109
  %v298 = vpop.f32.mrb[0].mxu0
  %v299 = vadd.f32 0.0, %v298
  %v300 = vpop.f32.mrb[0].mxu0
  %v301 = vadd.f32 0.0, %v300
  %v302 = vpop.f32.mrb[0].mxu0
  %v303 = vadd.f32 0.0, %v302
  %v304 = vpop.f32.mrb[0].mxu0
  %v305 = vadd.f32 0.0, %v304
  %306 = vmatprep.mubr.bf16.mxu0 %v262
  %307 = vmatmul.mubr.bf16.gmra.mrb[0].mxu0 %v112
  %v308 = vpop.f32.mrb[0].mxu0
  %v309 = vadd.f32 0.0, %v308
  %v310 = vpop.f32.mrb[0].mxu0
  %v311 = vadd.f32 0.0, %v310
  %v312 = vpop.f32.mrb[0].mxu0
  %v313 = vadd.f32 0.0, %v312
  %v314 = vpop.f32.mrb[0].mxu0
  %v315 = vadd.f32 0.0, %v314
  %316 = vdwg.mxu0
  %v317 = vld [vmem:[%s3] sm:$0x1]
  %v319 = vlaneseq
  %v320 = vshrl.u32 %v319, 7
  %v321 = vsub.s32 0, %v320
  %v322 = vrot.slane %v317, %v321
  %v324 = vadd.f32 %v299, %v322
  %v325 = vadd.f32 %v303, %v322
  %v326 = vadd.f32 %v309, %v322
  %v327 = vadd.f32 %v313, %v322
  %v328 = vld [vmem:[%s9] sm:$0x1]
  %v330 = vlaneseq
  %v331 = vshrl.u32 %v330, 7
  %v332 = vsub.s32 0, %v331
  %v333 = vrot.slane %v328, %v332
  %v335 = vadd.f32 %v301, %v333
  %v336 = vadd.f32 %v305, %v333
  %v337 = vadd.f32 %v311, %v333
  %v338 = vadd.f32 %v315, %v333
  %v339 = vadd.f32 %v324, %v325
  %v340 = vadd.f32 %v339, %v326
  %v341 = vadd.f32 %v340, %v327
  %v342 = vrot.slane %v341, 4
  %v343 = vadd.f32 %v341, %v342
  %v344 = vrot.slane %v343, 2
  %v345 = vadd.f32 %v343, %v344
  %v346 = vrot.slane %v345, 1
  %v347 = vadd.f32 %v345, %v346
  %v348 = vmul.f32 %v324, %v324
  %v349 = vmul.f32 %v325, %v325
  %v350 = vmul.f32 %v326, %v326
  %v351 = vmul.f32 %v327, %v327
  %v352 = vadd.f32 %v348, %v349
  %v353 = vadd.f32 %v352, %v350
  %v354 = vadd.f32 %v353, %v351
  %v355 = vrot.slane %v354, 4
  %v356 = vadd.f32 %v354, %v355
  %v357 = vrot.slane %v356, 2
  %v358 = vadd.f32 %v356, %v357
  %v359 = vrot.slane %v358, 1
  %v360 = vadd.f32 %v358, %v359
  %vm361 = vcmask 1040384
  %v362 = vsel %vm361, %v347, %v360
  %363 = vrot.lane.b32.xlu0 %v362, 8
  %v364 = vpop.permute.xlu0 %363
  %v365 = vadd.f32 %v362, %v364
  %366 = vrot.lane.b32.xlu0 %v365, 16
  %v367 = vpop.permute.xlu0 %366
  %v368 = vadd.f32 %v365, %v367
  %369 = vrot.lane.b32.xlu0 %v368, 32
  %v370 = vpop.permute.xlu0 %369
  %v371 = vadd.f32 %v368, %v370
  %372 = vrot.lane.b32.xlu0 %v371, 64
  %v373 = vpop.permute.xlu0 %372
  %v374 = vadd.f32 %v371, %v373
  %v375 = vmul.f32 %v374, 0.001953125
  %v376 = vmul.f32 %v375, %v375
  %v378 = vrot.slane %v376, 7
  %v380 = vsub.f32 %v375, %v378
  %v381 = vlaneseq
  %v382 = vshrl.u32 %v381, 7
  %v383 = vsub.s32 0, %v382
  %v384 = vrot.slane %v375, %v383
  %v385 = vsub.f32 %v324, %v384
  %v386 = vsub.f32 %v325, %v384
  %v387 = vsub.f32 %v326, %v384
  %v388 = vsub.f32 %v327, %v384
  %v389 = vadd.f32 %v380, 1e-05
  %v390 = vrsqrt.pop %v389
  %v391 = vlaneseq
  %v392 = vshrl.u32 %v391, 7
  %v393 = vsub.s32 1, %v392
  %v394 = vrot.slane %v390, %v393
  %v395 = vmul.f32 %v385, %v394
  %v396 = vmul.f32 %v386, %v394
  %v397 = vmul.f32 %v387, %v394
  %v398 = vmul.f32 %v388, %v394
  %v399 = vld [vmem:[%s4] sm:$0x1]
  %v401 = vlaneseq
  %v402 = vshrl.u32 %v401, 7
  %v403 = vsub.s32 0, %v402
  %v404 = vrot.slane %v399, %v403
  %v406 = vmul.f32 %v395, %v404
  %v407 = vmul.f32 %v396, %v404
  %v408 = vmul.f32 %v397, %v404
  %v409 = vmul.f32 %v398, %v404
  %v410 = vld [vmem:[%s5] sm:$0x1]
  %v412 = vlaneseq
  %v413 = vshrl.u32 %v412, 7
  %v414 = vsub.s32 0, %v413
  %v415 = vrot.slane %v410, %v414
  %v417 = vadd.f32 %v406, %v415
  %v418 = vadd.f32 %v407, %v415
  %v419 = vadd.f32 %v408, %v415
  %v420 = vadd.f32 %v409, %v415
  %v421 = vmax.f32 %v417, 0.0
  %v422 = vmax.f32 %v418, 0.0
  %v423 = vmax.f32 %v419, 0.0
  %v424 = vmax.f32 %v420, 0.0
  %v425 = vpack.c.bf16 %v422, %v421
  %v426 = vpack.c.bf16 %v424, %v423
  %v428 = vshrl.u32 %v425, 16
  %v430 = vrot.slane %v428, 7
  %v431 = vshll.u32 %v425, 16
  %v433 = vor.u32 %v430, %v431
  %v435 = vshrl.u32 %v426, 16
  %v437 = vrot.slane %v435, 7
  %v438 = vshll.u32 %v426, 16
  %v440 = vor.u32 %v437, %v438
  %v445 = vsel %vm62, 0, %v433
  %v446 = vsel %vm62, 0, %v440
  %v447 = vsel %vm62, %v430, 0
  %v448 = vsel %vm62, %v437, 0
  %v450 = vshrl.u32 %v445, 16
  %v452 = vshll.u32 %v445, 16
  %v454 = vrot.slane %v452, 1
  %v455 = vor.u32 %v450, %v454
  %v457 = vshll.u32 %v447, 16
  %v459 = vrot.slane %v457, 1
  %v460 = vsel %vm67, %v455, %v459
  %v462 = vshrl.u32 %v446, 16
  %v464 = vshll.u32 %v446, 16
  %v466 = vrot.slane %v464, 1
  %v467 = vor.u32 %v462, %v466
  %v469 = vshll.u32 %v448, 16
  %v471 = vrot.slane %v469, 1
  %v472 = vsel %vm67, %v467, %v471
  %v479 = vrot.slane %v445, 1
  %v480 = vrot.slane %v447, 1
  %v481 = vsel %vm100, %v479, %v480
  %v482 = vrot.slane %v446, 1
  %v483 = vrot.slane %v448, 1
  %v484 = vsel %vm100, %v482, %v483
  %v487 = vld [vmem:[%s2] sm:$0xf]
  %v488 = vld [vmem:[%s2 + $0x4] sm:$0xf]
  %v489 = vld [vmem:[%s2 + $0x8] sm:$0xf]
  %v490 = vld [vmem:[%s2 + $0xc] sm:$0xf]
  %v491 = vld [vmem:[%s2 + $0x10] sm:$0xf]
  %v492 = vld [vmem:[%s2 + $0x14] sm:$0xf]
  %v493 = vld [vmem:[%s2 + $0x18] sm:$0xf]
  %v494 = vld [vmem:[%s2 + $0x1c] sm:$0xf]
  %v495 = vld [vmem:[%s2 + $0x20] sm:$0xf]
  %v496 = vld [vmem:[%s2 + $0x24] sm:$0xf]
  %v497 = vld [vmem:[%s2 + $0x28] sm:$0xf]
  %v498 = vld [vmem:[%s2 + $0x2c] sm:$0xf]
  %v499 = vld [vmem:[%s2 + $0x30] sm:$0xf]
  %v500 = vld [vmem:[%s2 + $0x34] sm:$0xf]
  %v501 = vld [vmem:[%s2 + $0x38] sm:$0xf]
  %v502 = vld [vmem:[%s2 + $0x3c] sm:$0xf]
  %v503 = vld [vmem:[%s2 + $0x40] sm:$0xf]
  %v504 = vld [vmem:[%s2 + $0x44] sm:$0xf]
  %v505 = vld [vmem:[%s2 + $0x48] sm:$0xf]
  %v506 = vld [vmem:[%s2 + $0x4c] sm:$0xf]
  %v507 = vld [vmem:[%s2 + $0x50] sm:$0xf]
  %v508 = vld [vmem:[%s2 + $0x54] sm:$0xf]
  %v509 = vld [vmem:[%s2 + $0x58] sm:$0xf]
  %v510 = vld [vmem:[%s2 + $0x5c] sm:$0xf]
  %v511 = vld [vmem:[%s2 + $0x60] sm:$0xf]
  %v512 = vld [vmem:[%s2 + $0x64] sm:$0xf]
  %v513 = vld [vmem:[%s2 + $0x68] sm:$0xf]
  %v514 = vld [vmem:[%s2 + $0x6c] sm:$0xf]
  %v515 = vld [vmem:[%s2 + $0x70] sm:$0xf]
  %v516 = vld [vmem:[%s2 + $0x74] sm:$0xf]
  %v517 = vld [vmem:[%s2 + $0x78] sm:$0xf]
  %v518 = vld [vmem:[%s2 + $0x7c] sm:$0xf]
  %v519 = vld [vmem:[%s2 + $0x80] sm:$0xf]
  %v520 = vld [vmem:[%s2 + $0x84] sm:$0xf]
  %v521 = vld [vmem:[%s2 + $0x88] sm:$0xf]
  %v522 = vld [vmem:[%s2 + $0x8c] sm:$0xf]
  %v523 = vld [vmem:[%s2 + $0x90] sm:$0xf]
  %v524 = vld [vmem:[%s2 + $0x94] sm:$0xf]
  %v525 = vld [vmem:[%s2 + $0x98] sm:$0xf]
  %v526 = vld [vmem:[%s2 + $0x9c] sm:$0xf]
  %v527 = vld [vmem:[%s2 + $0xa0] sm:$0xf]
  %v528 = vld [vmem:[%s2 + $0xa4] sm:$0xf]
  %v529 = vld [vmem:[%s2 + $0xa8] sm:$0xf]
  %v530 = vld [vmem:[%s2 + $0xac] sm:$0xf]
  %v531 = vld [vmem:[%s2 + $0xb0] sm:$0xf]
  %v532 = vld [vmem:[%s2 + $0xb4] sm:$0xf]
  %v533 = vld [vmem:[%s2 + $0xb8] sm:$0xf]
  %v534 = vld [vmem:[%s2 + $0xbc] sm:$0xf]
  %v535 = vld [vmem:[%s6] sm:$0x1]
  %v537 = vlaneseq
  %v538 = vshrl.u32 %v537, 7
  %v539 = vsub.s32 0, %v538
  %v540 = vrot.slane %v535, %v539
  %v590 = vunpack.c.l.b16 %v487
  %v591 = vunpack.c.l.b16 %v488
  %v592 = vunpack.c.l.b16 %v489
  %v593 = vunpack.c.l.b16 %v490
  %v594 = vunpack.c.l.b16 %v491
  %v595 = vunpack.c.l.b16 %v492
  %v596 = vunpack.c.l.b16 %v493
  %v597 = vunpack.c.l.b16 %v494
  %v598 = vunpack.c.l.b16 %v495
  %v599 = vunpack.c.l.b16 %v496
  %v600 = vunpack.c.l.b16 %v497
  %v601 = vunpack.c.l.b16 %v498
  %v602 = vunpack.c.l.b16 %v499
  %v603 = vunpack.c.l.b16 %v500
  %v604 = vunpack.c.l.b16 %v501
  %v605 = vunpack.c.l.b16 %v502
  %v606 = vunpack.c.l.b16 %v503
  %v607 = vunpack.c.l.b16 %v504
  %v608 = vunpack.c.l.b16 %v505
  %v609 = vunpack.c.l.b16 %v506
  %v610 = vunpack.c.l.b16 %v507
  %v611 = vunpack.c.l.b16 %v508
  %v612 = vunpack.c.l.b16 %v509
  %v613 = vunpack.c.l.b16 %v510
  %v614 = vunpack.c.l.b16 %v511
  %v615 = vunpack.c.l.b16 %v512
  %v616 = vunpack.c.l.b16 %v513
  %v617 = vunpack.c.l.b16 %v514
  %v618 = vunpack.c.l.b16 %v515
  %v619 = vunpack.c.l.b16 %v516
  %v620 = vunpack.c.l.b16 %v517
  %v621 = vunpack.c.l.b16 %v518
  %v622 = vunpack.c.l.b16 %v519
  %v623 = vunpack.c.l.b16 %v520
  %v624 = vunpack.c.l.b16 %v521
  %v625 = vunpack.c.l.b16 %v522
  %v626 = vunpack.c.l.b16 %v523
  %v627 = vunpack.c.l.b16 %v524
  %v628 = vunpack.c.l.b16 %v525
  %v629 = vunpack.c.l.b16 %v526
  %v630 = vunpack.c.l.b16 %v527
  %v631 = vunpack.c.l.b16 %v528
  %v632 = vunpack.c.l.b16 %v529
  %v633 = vunpack.c.l.b16 %v530
  %v634 = vunpack.c.l.b16 %v531
  %v635 = vunpack.c.l.b16 %v532
  %v636 = vunpack.c.l.b16 %v533
  %v637 = vunpack.c.l.b16 %v534
  %v638 = vpack.c.b16 %v591, %v590
  %v639 = vpack.c.b16 %v593, %v592
  %v640 = vpack.c.b16 %v595, %v594
  %v641 = vpack.c.b16 %v597, %v596
  %v642 = vpack.c.b16 %v599, %v598
  %v643 = vpack.c.b16 %v601, %v600
  %v644 = vpack.c.b16 %v603, %v602
  %v645 = vpack.c.b16 %v605, %v604
  %v646 = vpack.c.b16 %v607, %v606
  %v647 = vpack.c.b16 %v609, %v608
  %v648 = vpack.c.b16 %v611, %v610
  %v649 = vpack.c.b16 %v613, %v612
  %v650 = vpack.c.b16 %v615, %v614
  %v651 = vpack.c.b16 %v617, %v616
  %v652 = vpack.c.b16 %v619, %v618
  %v653 = vpack.c.b16 %v621, %v620
  %v654 = vpack.c.b16 %v623, %v622
  %v655 = vpack.c.b16 %v625, %v624
  %v656 = vpack.c.b16 %v627, %v626
  %v657 = vpack.c.b16 %v629, %v628
  %v658 = vpack.c.b16 %v631, %v630
  %v659 = vpack.c.b16 %v633, %v632
  %v660 = vpack.c.b16 %v635, %v634
  %v661 = vpack.c.b16 %v637, %v636
  %686 = vmatprep.subr.bf16.mxu0 0
  %687 = vmatpush1.bf16.msra.mxu0 %v638
  %688 = vmatprep.subr.bf16.mxu0 0
  %689 = vmatpush1.bf16.msra.mxu0 %v639
  %690 = vmatprep.subr.bf16.mxu0 0
  %691 = vmatpush1.bf16.msra.mxu0 %v640
  %692 = vmatprep.subr.bf16.mxu0 0
  %693 = vmatpush1.bf16.msra.mxu0 %v641
  %694 = vmatprep.subr.bf16.mxu0 0
  %695 = vmatpush1.bf16.msra.mxu0 %v642
  %696 = vmatprep.subr.bf16.mxu0 0
  %697 = vmatpush1.bf16.msra.mxu0 %v643
  %698 = vmatprep.subr.bf16.mxu0 0
  %699 = vmatpush1.bf16.msra.mxu0 %v644
  %700 = vmatprep.subr.bf16.mxu0 0
  %701 = vmatpush1.bf16.msra.mxu0 %v645
  %702 = vmatprep.subr.bf16.mxu0 0
  %703 = vmatpush1.bf16.msra.mxu0 %v646
  %704 = vmatprep.subr.bf16.mxu0 0
  %705 = vmatpush1.bf16.msra.mxu0 %v647
  %706 = vmatprep.subr.bf16.mxu0 0
  %707 = vmatpush1.bf16.msra.mxu0 %v648
  %708 = vmatprep.subr.bf16.mxu0 0
  %709 = vmatpush1.bf16.msra.mxu0 %v649
  %710 = vmatprep.subr.bf16.mxu0 0
  %711 = vmatpush1.bf16.msra.mxu0 %v650
  %712 = vmatprep.subr.bf16.mxu0 0
  %713 = vmatpush1.bf16.msra.mxu0 %v651
  %714 = vmatprep.subr.bf16.mxu0 0
  %715 = vmatpush1.bf16.msra.mxu0 %v652
  %716 = vmatprep.subr.bf16.mxu0 0
  %717 = vmatpush1.bf16.msra.mxu0 %v653
  %718 = vmatprep.mubr.bf16.mxu0 %v460
  %719 = vmatmul.mubr.bf16.gmra.mrb[0].mxu0 %v445
  %v720 = vpop.f32.mrb[0].mxu0
  %v721 = vadd.f32 %v540, %v720
  %v722 = vpop.f32.mrb[0].mxu0
  %v723 = vpop.f32.mrb[0].mxu0
  %v724 = vadd.f32 %v540, %v723
  %v725 = vpop.f32.mrb[0].mxu0
  %726 = vmatprep.mubr.bf16.mxu0 %v472
  %727 = vmatmul.mubr.bf16.gmra.mrb[0].mxu0 %v446
  %v728 = vpop.f32.mrb[0].mxu0
  %v729 = vadd.f32 %v540, %v728
  %v730 = vpop.f32.mrb[0].mxu0
  %v731 = vpop.f32.mrb[0].mxu0
  %v732 = vadd.f32 %v540, %v731
  %v733 = vpop.f32.mrb[0].mxu0
  %734 = vdwg.mxu0
  %735 = vmatprep.subr.bf16.mxu0 0
  %736 = vmatpush1.bf16.msra.mxu0 %v654
  %737 = vmatprep.subr.bf16.mxu0 0
  %738 = vmatpush1.bf16.msra.mxu0 %v655
  %739 = vmatprep.subr.bf16.mxu0 0
  %740 = vmatpush1.bf16.msra.mxu0 %v656
  %741 = vmatprep.subr.bf16.mxu0 0
  %742 = vmatpush1.bf16.msra.mxu0 %v657
  %743 = vmatprep.subr.bf16.mxu0 0
  %744 = vmatpush1.bf16.msra.mxu0 %v658
  %745 = vmatprep.subr.bf16.mxu0 0
  %746 = vmatpush1.bf16.msra.mxu0 %v659
  %747 = vmatprep.subr.bf16.mxu0 0
  %748 = vmatpush1.bf16.msra.mxu0 %v660
  %749 = vmatprep.subr.bf16.mxu0 0
  %750 = vmatpush1.bf16.msra.mxu0 %v661
  %751 = vmatprep.subr.bf16.mxu0 0
  %752 = vmatpush1.bf16.msra.mxu0 0
  %753 = vmatprep.subr.bf16.mxu0 0
  %754 = vmatpush1.bf16.msra.mxu0 0
  %755 = vmatprep.subr.bf16.mxu0 0
  %756 = vmatpush1.bf16.msra.mxu0 0
  %757 = vmatprep.subr.bf16.mxu0 0
  %758 = vmatpush1.bf16.msra.mxu0 0
  %759 = vmatprep.subr.bf16.mxu0 0
  %760 = vmatpush1.bf16.msra.mxu0 0
  %761 = vmatprep.subr.bf16.mxu0 0
  %762 = vmatpush1.bf16.msra.mxu0 0
  %763 = vmatprep.subr.bf16.mxu0 0
  %764 = vmatpush1.bf16.msra.mxu0 0
  %765 = vmatprep.subr.bf16.mxu0 0
  %766 = vmatpush1.bf16.msra.mxu0 0
  %767 = vmatprep.mubr.bf16.mxu0 0
  %768 = vmatmul.mubr.bf16.gmra.mrb[0].mxu0 %v481
  %v769 = vpop.f32.mrb[0].mxu0
  %v770 = vadd.f32 %v721, %v769
  %v771 = vpop.f32.mrb[0].mxu0
  %v772 = vpop.f32.mrb[0].mxu0
  %v773 = vadd.f32 %v724, %v772
  %v774 = vpop.f32.mrb[0].mxu0
  %775 = vmatprep.mubr.bf16.mxu0 0
  %776 = vmatmul.mubr.bf16.gmra.mrb[0].mxu0 %v484
  %v777 = vpop.f32.mrb[0].mxu0
  %v778 = vadd.f32 %v729, %v777
  %v779 = vpop.f32.mrb[0].mxu0
  %v780 = vpop.f32.mrb[0].mxu0
  %v781 = vadd.f32 %v732, %v780
  %v782 = vpop.f32.mrb[0].mxu0
  %783 = vdwg.mxu0
  %v784 = vadd.f32 %v770, %v773
  %v785 = vadd.f32 %v784, %v778
  %v786 = vadd.f32 %v785, %v781
  %v787 = vrot.slane %v786, 4
  %v788 = vadd.f32 %v786, %v787
  %v789 = vrot.slane %v788, 2
  %v790 = vadd.f32 %v788, %v789
  %v791 = vrot.slane %v790, 1
  %v792 = vadd.f32 %v790, %v791
  %v793 = vmul.f32 %v770, %v770
  %v794 = vmul.f32 %v773, %v773
  %v795 = vmul.f32 %v778, %v778
  %v796 = vmul.f32 %v781, %v781
  %v797 = vadd.f32 %v793, %v794
  %v798 = vadd.f32 %v797, %v795
  %v799 = vadd.f32 %v798, %v796
  %v800 = vrot.slane %v799, 4
  %v801 = vadd.f32 %v799, %v800
  %v802 = vrot.slane %v801, 2
  %v803 = vadd.f32 %v801, %v802
  %v804 = vrot.slane %v803, 1
  %v805 = vadd.f32 %v803, %v804
  %v806 = vsel %vm361, %v792, %v805
  %807 = vrot.lane.b32.xlu0 %v806, 8
  %v808 = vpop.permute.xlu0 %807
  %v809 = vadd.f32 %v806, %v808
  %810 = vrot.lane.b32.xlu0 %v809, 16
  %v811 = vpop.permute.xlu0 %810
  %v812 = vadd.f32 %v809, %v811
  %813 = vrot.lane.b32.xlu0 %v812, 32
  %v814 = vpop.permute.xlu0 %813
  %v815 = vadd.f32 %v812, %v814
  %816 = vrot.lane.b32.xlu0 %v815, 64
  %v817 = vpop.permute.xlu0 %816
  %v818 = vadd.f32 %v815, %v817
  %v819 = vmul.f32 %v818, 0.001953125
  %v820 = vmul.f32 %v819, %v819
  %v822 = vrot.slane %v820, 7
  %v824 = vsub.f32 %v819, %v822
  %v825 = vlaneseq
  %v826 = vshrl.u32 %v825, 7
  %v827 = vsub.s32 0, %v826
  %v828 = vrot.slane %v819, %v827
  %v829 = vsub.f32 %v770, %v828
  %v830 = vsub.f32 %v773, %v828
  %v831 = vsub.f32 %v778, %v828
  %v832 = vsub.f32 %v781, %v828
  %v833 = vadd.f32 %v824, 1e-05
  %v834 = vrsqrt.pop %v833
  %v835 = vlaneseq
  %v836 = vshrl.u32 %v835, 7
  %v837 = vsub.s32 1, %v836
  %v838 = vrot.slane %v834, %v837
  %v839 = vmul.f32 %v829, %v838
  %v840 = vmul.f32 %v830, %v838
  %v841 = vmul.f32 %v831, %v838
  %v842 = vmul.f32 %v832, %v838
  %v843 = vld [vmem:[%s7] sm:$0x1]
  %v845 = vlaneseq
  %v846 = vshrl.u32 %v845, 7
  %v847 = vsub.s32 0, %v846
  %v848 = vrot.slane %v843, %v847
  %v850 = vmul.f32 %v839, %v848
  %v851 = vmul.f32 %v840, %v848
  %v852 = vmul.f32 %v841, %v848
  %v853 = vmul.f32 %v842, %v848
  %v854 = vld [vmem:[%s8] sm:$0x1]
  %v856 = vlaneseq
  %v857 = vshrl.u32 %v856, 7
  %v858 = vsub.s32 0, %v857
  %v859 = vrot.slane %v854, %v858
  %v861 = vadd.f32 %v850, %v859
  %v862 = vadd.f32 %v851, %v859
  %v863 = vadd.f32 %v852, %v859
  %v864 = vadd.f32 %v853, %v859
  %v865 = vadd.f32 %v861, %v335
  %v866 = vadd.f32 %v862, %v336
  %v867 = vadd.f32 %v863, %v337
  %v868 = vadd.f32 %v864, %v338
  %v869 = vmax.f32 %v865, 0.0
  %v870 = vmax.f32 %v866, 0.0
  %v871 = vmax.f32 %v867, 0.0
  %v872 = vmax.f32 %v868, 0.0
  %873 = vst [vmem:[%s10] sm:$0xff] %v869
  %874 = vst [vmem:[%s10 + $0x8] sm:$0xff] %v870
  %875 = vst [vmem:[%s10 + $0x10] sm:$0xff] %v871
  %876 = vst [vmem:[%s10 + $0x18] sm:$0xff] %v872
  // Predicated region
  $region42: #{residual_forward.1} parent=0 // pred_check
    _
  $region43: #{residual_forward.1} parent=0 // pred_check_branch
    %878 = sbr.rel (0) target = $region45
  $region44: #{residual_forward.1} parent=0 // pred_region
    _
  $region45: #{residual_forward.1} parent=0 // pred_fallthru
    _
  // Predicated region
  $region46: #{residual_forward.1} parent=0 // pred_check
    _
  $region47: #{residual_forward.1} parent=0 // pred_check_branch
    %880 = sbr.rel (0) target = $region49
  $region48: #{residual_forward.1} parent=0 // pred_region
    _
  $region49: #{residual_forward.1} parent=0 // pred_fallthru
    _

</llo_original>
